<compile_context>
chip_gen: v7x
topology: tpu7x:2x2x1
jax: 0.10.0
libtpu: 0.0.40
codegen_flags: <defaults>
</compile_context>

<pallas_src>
import jax
import jax.numpy as jnp
from jax import lax
from jax.experimental import pallas as pl
from jax.experimental.pallas import tpu as pltpu

_LANE = 128
_MAX_LANES = 4096
_TARGET_BLOCK_BYTES = 4 * 1024 * 1024   # ~4 MiB per block (2in+2out = 16 MiB VMEM)
_MIN_SPLIT_BYTES = 2 * 1024 * 1024      # above this, force >=2 grid steps (v7x 2 TCs)
_VMEM_LIMIT_BYTES = 32 * 1024 * 1024    # explicit scoped-VMEM limit (safe on v5e/v6e/v7x)


def _round_kernel(x_ref, o_ref):
    # Native VPU round, half-to-even (== torch.round / jnp.round).
    o_ref[...] = lax.round(x_ref[...], lax.RoundingMethod.TO_NEAREST_EVEN)


def _sublane_pack(itemsize: int) -> int:
    # Packed sublane granularity per dtype width: f32->8, bf16/f16->16, 8-bit->32.
    return {4: 8, 2: 16, 1: 32}.get(itemsize, 8)


def _pick_lanes(n: int) -> int:
    for cand in (_MAX_LANES, 2048, 1024, 512, 256):
        if n % cand == 0:
            return cand
    return _LANE


def _pick_tile_rows(rows: int, lanes: int, itemsize: int, total_bytes: int) -> int:
    pack = _sublane_pack(itemsize)
    rows_per_block = _TARGET_BLOCK_BYTES // (lanes * itemsize)
    rows_per_block = max(pack, (rows_per_block // pack) * pack)

    if rows <= rows_per_block:
        # Small/medium tensor. On v7x (2 TCs) still split into >=2 blocks once the
        # tensor is worth splitting, so the parallel grid axis uses both cores.
        if total_bytes >= _MIN_SPLIT_BYTES and rows >= 2 * pack:
            n_blocks = min(8, rows // pack)
            tile_rows = max(pack, ((rows // n_blocks) // pack) * pack)
        else:
            return rows  # single full-dim block (always layout-legal)
    else:
        tile_rows = rows_per_block

    # Prefer an exact divisor of `rows`: keeps every step full-width / unmasked.
    if rows % tile_rows:
        cand = tile_rows
        floor = max(pack, tile_rows // 2)
        while cand >= floor:
            if rows % cand == 0:
                return cand
            cand -= pack
    return tile_rows


def bn_round(x: jax.Array) -> jax.Array:
    """Elementwise round (half-to-even) of an arbitrary-shape array (== torch.round)."""
    orig_shape = x.shape
    dtype = x.dtype

    # torch.round on integer / bool tensors is the identity.
    if not jnp.issubdtype(dtype, jnp.floating):
        return x

    total = x.size
    if total == 0:
        return x

    itemsize = jnp.dtype(dtype).itemsize
    x_flat = x.reshape(-1)  # bitcast-style reshape, no HBM copy

    rem = total % _LANE
    main = total - rem
    if main == 0:
        # Sub-128-element tensor: not worth a kernel launch.
        return jnp.round(x)

    # Lane-aligned prefix goes through the Pallas kernel.
    x_main = x_flat if rem == 0 else x_flat[:main]
    lanes = _pick_lanes(main)
    rows = main // lanes
    x2d = x_main.reshape(rows, lanes)  # no copy

    tile_rows = _pick_tile_rows(rows, lanes, itemsize, main * itemsize)
    grid = (pl.cdiv(rows, tile_rows),)

    cost = pl.CostEstimate(
        flops=main,
        transcendentals=0,
        bytes_accessed=2 * main * itemsize,
    )

    out2d = pl.pallas_call(
        _round_kernel,
        out_shape=jax.ShapeDtypeStruct((rows, lanes), dtype),
        grid_spec=pltpu.PrefetchScalarGridSpec(
            num_scalar_prefetch=0,
            grid=grid,
            in_specs=[pl.BlockSpec((tile_rows, lanes), lambda i: (i, 0))],
            out_specs=pl.BlockSpec((tile_rows, lanes), lambda i: (i, 0)),
        ),
        compiler_params=pltpu.CompilerParams(
            dimension_semantics=("parallel",),
            vmem_limit_bytes=_VMEM_LIMIT_BYTES,
        ),
        cost_estimate=cost,
    )(x2d)

    out_main = out2d.reshape(-1)
    if rem:
        # <=127-element tail: round with plain XLA; avoids full-tensor pad/slice passes.
        out_tail = jnp.round(x_flat[main:])
        out_flat = jnp.concatenate([out_main, out_tail])
    else:
        out_flat = out_main
    return out_flat.reshape(orig_shape)


if __name__ == "__main__":
    root = jax.random.PRNGKey(0)
    k0, k1 = jax.random.split(root)

    # NCHW input consistent with BnRound.forward: batch=2, channels=4, 16x16 spatial.
    x = jax.random.normal(k0, (2, 4, 16, 16), dtype=jnp.float32) * 3.0
    # Exact .5 values exercise round-half-to-even.
    x = x.at[0, 0, 0, :4].set(jnp.array([0.5, 1.5, 2.5, -0.5], dtype=jnp.float32))

    y = bn_round(x)
    jax.block_until_ready(y)
    y_ref = jnp.round(x)  # same half-to-even semantics as torch.round
    assert y.shape == x.shape and y.dtype == x.dtype
    assert jnp.array_equal(y, y_ref)

    # Ragged path: total % 128 != 0 -> aligned prefix via the kernel, tiny tail via jnp.round.
    x2 = jax.random.normal(k1, (3, 5, 7, 11), dtype=jnp.float32) * 5.0
    y2 = bn_round(x2)
    jax.block_until_ready(y2)
    assert y2.shape == x2.shape and y2.dtype == x2.dtype
    assert jnp.array_equal(y2, jnp.round(x2))

    print("KERNEL_OK")
</pallas_src>

<mosaic_0001>
module attributes {stable_mosaic.version = 11 : i64} {
  func.func @_round_kernel(%arg0: i32, %arg1: memref<1x2048xf32, #tpu.memory_space<vmem>>, %arg2: memref<1x2048xf32, #tpu.memory_space<vmem>>) attributes {dimension_semantics = [#tpu.dimension_semantics<parallel>], iteration_bounds = array<i64: 1>, scalar_prefetch = 0 : i64, scratch_operands = 0 : i64, tpu.core_type = #tpu.core_type<tc>, window_params = [{transform_indices = @transform_0, window_bounds = array<i64: 1, 2048>}, {transform_indices = @transform_1, window_bounds = array<i64: 1, 2048>}]} {
    %c0 = arith.constant 0 : index
    %c0_0 = arith.constant 0 : index
    %0 = vector.load %arg1[%c0, %c0_0] : memref<1x2048xf32, #tpu.memory_space<vmem>>, vector<1x2048xf32>
    %1 = math.roundeven %0 : vector<1x2048xf32>
    %c0_1 = arith.constant 0 : index
    %c0_2 = arith.constant 0 : index
    %2 = vector.load %arg2[%c0_1, %c0_2] : memref<1x2048xf32, #tpu.memory_space<vmem>>, vector<1x2048xf32>
    tpu.vector_store %arg2[%c0_1, %c0_2], %1 {strides = array<i32>} : memref<1x2048xf32, #tpu.memory_space<vmem>>, vector<1x2048xf32>,
    return
  }
  func.func @transform_0(%arg0: i32) -> (i32, i32) {
    %c0_i32 = arith.constant 0 : i32
    %c0_i32_0 = arith.constant 0 : i32
    return %arg0, %c0_i32 : i32, i32
  }
  func.func @transform_1(%arg0: i32) -> (i32, i32) {
    %c0_i32 = arith.constant 0 : i32
    %c0_i32_0 = arith.constant 0 : i32
    return %arg0, %c0_i32 : i32, i32
  }
}

</mosaic_0001>

<llo_original>
// kernel: tpu_custom_call.1
$region0: #{tpu_custom_call.1}
  #allocation0 [shape = 'u32[]', space=smem, size = 0x4, offset = 0x4, fixed_abs, tag = 'smem constant byte address 0x4 - core index']
  #allocation1 [shape = 'u32[144,128]{1,0:T(1,128)}', space=vmem, size = 0x12000, scoped, tag = 'internal scratch']
  %s0 = inlined_call_operand.hbm [shape: f32[1,2048], index: 0, kind: input, shape index: {}]
  %s1 = inlined_call_operand.hbm [shape: f32[1,2048], index: 1, kind: output, shape index: {}]
  %s2 = sld [smem:[#allocation0]]
  $region18: #{tpu_custom_call.1} parent=0
    _
  %s4 = ssub.s32 1, %s2
  %s5 = scalar_select 0, %s4, %s2
  $region1: #{tpu_custom_call.1} parent=0
    #allocation2 [shape = 'u8[8192]{0}', space=vmem, size = 0x2000, scoped, tag = 'input window, operand 0, single buffered']
    #allocation3 [shape = 's32[1]{0}', space=sflag, size = 0x4, scoped, tag = 'scoped memory for tpu_custom_call.1']
    #allocation4 [shape = 's32[1]{0}', space=sflag, size = 0x4, scoped, tag = 'scoped memory for tpu_custom_call.1']
    #allocation5 [shape = 'u8[8192]{0}', space=vmem, size = 0x2000, scoped, tag = 'output window, operand 0, single buffered']
    %6 = vsyncpa [#allocation3], 0
    %7 = vsyncpa [#allocation4], 0
    // Predicated region
    $region2: #{tpu_custom_call.1} parent=1 // pred_check
      _
    $region3: #{tpu_custom_call.1} parent=1 // pred_check_branch
      %9 = sbr.rel (0) target = $region5
    $region4: #{tpu_custom_call.1} parent=1 // pred_region
      %s11 = ssub.s32 256, 256
      %12 = vsyncadd [#allocation3], %s11
      %s14 = sshll.u32 [#allocation2], 4
      %s15 = int_to_ptr.vmem [resolvable:$true] %s14
      %17 = dma.hbm_to_vmem [thread:$0]  %s0, 256, %s15, [#allocation3]
    $region5: #{tpu_custom_call.1} parent=1 // pred_fallthru
      _
    // Predicated region
    $region6: #{tpu_custom_call.1} parent=1 // pred_check
      _
    $region7: #{tpu_custom_call.1} parent=1 // pred_check_branch
      %19 = sbr.rel (0) target = $region9
    $region8: #{tpu_custom_call.1} parent=1 // pred_region
      %20 = dma.done [#allocation3], 256
    $region9: #{tpu_custom_call.1} parent=1 // pred_fallthru
      _
    %v21 = vld [vmem:[#allocation2] sm:$0xff]
    %v22 = vld [vmem:[#allocation2 + $0x8] sm:$0xff]
    %v23 = vround.ne.pseudo %v21
    %v24 = vround.ne.pseudo %v22
    %25 = vst [vmem:[#allocation5] sm:$0xff] %v23
    %26 = vst [vmem:[#allocation5 + $0x8] sm:$0xff] %v24
    // Predicated region
    $region10: #{tpu_custom_call.1} parent=1 // pred_check
      _
    $region11: #{tpu_custom_call.1} parent=1 // pred_check_branch
      %28 = sbr.rel (0) target = $region13
    $region12: #{tpu_custom_call.1} parent=1 // pred_region
      %s30 = ssub.s32 256, 256
      %31 = vsyncadd [#allocation4], %s30
      %s33 = sshll.u32 [#allocation5], 4
      %s34 = int_to_ptr.vmem [resolvable:$true] %s33
      %36 = dma.vmem_to_hbm [thread:$0]  %s34, 256, %s1, [#allocation4]
    $region13: #{tpu_custom_call.1} parent=1 // pred_fallthru
      _
    // Predicated region
    $region14: #{tpu_custom_call.1} parent=1 // pred_check
      _
    $region15: #{tpu_custom_call.1} parent=1 // pred_check_branch
      %38 = sbr.rel (0) target = $region17
    $region16: #{tpu_custom_call.1} parent=1 // pred_region
      %39 = dma.done [#allocation4], 256
    $region17: #{tpu_custom_call.1} parent=1 // pred_fallthru
      _
    %40 = vsyncpa [#allocation3], 1
    %41 = vsyncpa [#allocation4], 1

</llo_original>
